<compile_context>
chip_gen: v7x
topology: tpu7x:2x2x1
jax: 0.10.0
libtpu: 0.0.40
codegen_flags: <defaults>
</compile_context>

<pallas_src>
import jax
import jax.numpy as jnp
from jax.experimental import pallas as pl
from jax.experimental.pallas import tpu as pltpu

# Large finite negative instead of -inf: exp(mask - m) still underflows to
# exactly 0.0 (matching the reference softmax), but a fully-masked row would
# not produce NaN if query padding is ever added.
_MASK_VALUE = -1e30


def _attn_kernel(x_ref, wqkv_ref, bias_ref, o_ref):
    # x_ref:    (Bb, T, C)
    # wqkv_ref: (C, 3*Hp)   -- [scale*Wq | Wk | Wv], each zero-padded to Hp lanes
    # bias_ref: (T, T)      -- 0 on/below diagonal, large-negative above
    # o_ref:    (Bb, T, Hp)
    Bb, T, C = x_ref.shape
    Hp = o_ref.shape[-1]

    # Feed the MXU the storage dtype; accumulate in f32.
    x = x_ref[...].reshape(Bb * T, C)                               # (Bb*T, C)
    w = wqkv_ref[...]                                               # (C, 3*Hp)

    # Single fused projection on the flattened batch*seq slab (M = Bb*T).
    qkv = jnp.dot(x, w, preferred_element_type=jnp.float32)        # (Bb*T, 3*Hp)
    q = qkv[:, 0 * Hp:1 * Hp].reshape(Bb, T, Hp)
    k = qkv[:, 1 * Hp:2 * Hp].reshape(Bb, T, Hp)
    v = qkv[:, 2 * Hp:3 * Hp].reshape(Bb, T, Hp)

    # C**-0.5 (embed dim, matching the PyTorch module) is pre-folded into the
    # Wq columns of wqkv, so no per-step scale multiply here.
    sims = jnp.einsum('bqh,bkh->bqk', q, k,
                      preferred_element_type=jnp.float32)          # (Bb, T, T)

    # Causal mask == self.tril[:T, :T] as an additive bias (resident block).
    # TODO(synk): for large T, generate the mask in-kernel (broadcasted_iota)
    # and tile over the KV axis with an online-softmax accumulator instead of
    # materializing the full (Bb, T, T) sims.
    sims = sims + bias_ref[...]

    # Numerically stable softmax.  Exact divide: the approx EUP reciprocal
    # (~1e-4 rel. error) is not accurate enough for a 1e-5 comparison.
    m = jnp.max(sims, axis=-1, keepdims=True)
    p = jnp.exp(sims - m)
    denom = jnp.sum(p, axis=-1, keepdims=True)
    attn = p / denom                                               # (Bb, T, T)

    # TODO(synk): self.var / self.attentions are detached side-state buffers in
    # the PyTorch module (not part of the returned value); not materialized here.

    out = jnp.einsum('bqk,bkh->bqh', attn, v,
                     preferred_element_type=jnp.float32)           # (Bb, T, Hp)
    o_ref[...] = out.astype(o_ref.dtype)


def _pick_batch_block(B, T):
    """Batch elements per grid step.

    Total work small enough for one ~512-row slab -> single grid step (the toy
    shapes are pure launch/step-overhead bound; extra steps cost ~0.35us each
    for nothing).  For large B, pick the largest divisor of B giving a
    256-512-row slab so there are many grid steps and BlockSpec
    double-buffering overlaps the x DMA with compute, while keeping the
    per-step VMEM footprint small (well under v7x's 64 MiB).
    """
    target_rows = 512
    if B * T <= target_rows:
        return B
    best = 1
    for d in range(1, B + 1):
        if B % d == 0 and d * T <= target_rows:
            best = d
    return best


def prepare_head_v4(wq, wk, wv, block_size):
    """One-time prep (hoist out of the per-forward path).

    Pads the head dim to a 128-lane multiple, folds the C**-0.5 scale into the
    Wq columns, fuses [Wq|Wk|Wv] into one (C, 3*Hp) matrix, and builds the
    additive causal bias for T = block_size.
    Returns (wqkv, bias, head_size).
    """
    C, H = wq.shape
    Hp = ((H + 127) // 128) * 128
    pad = Hp - H

    wq_s = wq * (C ** -0.5)   # fold the sims scale into the query projection
    if pad:
        wq_s = jnp.pad(wq_s, ((0, 0), (0, pad)))
        wk_p = jnp.pad(wk, ((0, 0), (0, pad)))
        wv_p = jnp.pad(wv, ((0, 0), (0, pad)))
    else:
        wk_p, wv_p = wk, wv
    wqkv = jnp.concatenate([wq_s, wk_p, wv_p], axis=1)             # (C, 3*Hp)

    T = block_size
    tril = jnp.tril(jnp.ones((T, T), dtype=bool))
    bias = jnp.where(tril, 0.0, _MASK_VALUE).astype(jnp.float32)   # (T, T)
    return wqkv, bias, H


def head_v4_forward(x, wqkv, bias, head_size, *, batch_block=None):
    """x: (B, T, C); wqkv: (C, 3*Hp); bias: (T, T). Returns (B, T, head_size)."""
    B, T, C = x.shape
    Hp = wqkv.shape[1] // 3

    bb = _pick_batch_block(B, T) if batch_block is None else batch_block
    assert B % bb == 0, "batch_block must divide B"
    grid = (B // bb,)

    # Per-step VMEM footprint at bb*T <= 512 rows stays ~1-2 MiB, comfortably
    # inside the default scoped VMEM on v5e/v6e/v7x -> no vmem_limit override.
    out_padded = pl.pallas_call(
        _attn_kernel,
        out_shape=jax.ShapeDtypeStruct((B, T, Hp), x.dtype),
        grid_spec=pltpu.PrefetchScalarGridSpec(
            num_scalar_prefetch=0,
            grid=grid,
            in_specs=[
                pl.BlockSpec((bb, T, C), lambda b: (b, 0, 0)),
                pl.BlockSpec((C, 3 * Hp), lambda b: (0, 0)),
                pl.BlockSpec((T, T), lambda b: (0, 0)),
            ],
            out_specs=pl.BlockSpec((bb, T, Hp), lambda b: (b, 0, 0)),
        ),
        compiler_params=pltpu.CompilerParams(
            dimension_semantics=("parallel",),
        ),
    )(x, wqkv, bias)

    # Drop the zero-padded head columns outside the kernel.
    # TODO(synk): for large B with small H, consumers that accept the padded
    # (B, T, Hp) layout avoid this extra HBM read+write pass; irrelevant here.
    return out_padded[:, :, :head_size]


def _reference(x, wq, wk, wv):
    """Pure-JAX reference mirroring the PyTorch forward."""
    B, T, C = x.shape
    q = x @ wq
    k = x @ wk
    v = x @ wv
    sims = (q @ jnp.swapaxes(k, -2, -1)) * (C ** -0.5)
    tril = jnp.tril(jnp.ones((T, T), dtype=bool))
    sims = jnp.where(tril, sims, -jnp.inf)
    attn = jax.nn.softmax(sims, axis=-1)
    return attn @ v


if __name__ == "__main__":
    # Small shapes consistent with the module: block_size = T = 8,
    # embed_size = C = 32, head_size = H = 16.
    B, T, C, H = 2, 8, 32, 16

    key = jax.random.PRNGKey(0)
    kx, kq, kk, kv = jax.random.split(key, 4)
    x = jax.random.normal(kx, (B, T, C), dtype=jnp.float32)
    # deterministic "Linear(bias=False)"-style init, stored as (C, H) = weight.T
    wq = jax.random.normal(kq, (C, H), dtype=jnp.float32) * (C ** -0.5)
    wk = jax.random.normal(kk, (C, H), dtype=jnp.float32) * (C ** -0.5)
    wv = jax.random.normal(kv, (C, H), dtype=jnp.float32) * (C ** -0.5)

    # One-time weight/bias prep, hoisted out of the per-forward path.
    wqkv, bias, head_size = prepare_head_v4(wq, wk, wv, block_size=T)
    wqkv, bias = jax.block_until_ready((wqkv, bias))

    out = head_v4_forward(x, wqkv, bias, head_size)
    out = jax.block_until_ready(out)

    ref = _reference(x, wq, wk, wv)
    assert out.shape == (B, T, H)
    assert jnp.allclose(out, ref, atol=1e-5, rtol=1e-5), \
        float(jnp.max(jnp.abs(out - ref)))
    print("KERNEL_OK")
</pallas_src>

<mosaic_0001>
module attributes {stable_mosaic.version = 11 : i64} {
  func.func @_attn_kernel(%arg0: i32, %arg1: memref<2x8x32xf32, #tpu.memory_space<vmem>>, %arg2: memref<32x384xf32, #tpu.memory_space<vmem>>, %arg3: memref<8x8xf32, #tpu.memory_space<vmem>>, %arg4: memref<2x8x128xf32, #tpu.memory_space<vmem>>) attributes {dimension_semantics = [#tpu.dimension_semantics<parallel>], iteration_bounds = array<i64: 1>, scalar_prefetch = 0 : i64, scratch_operands = 0 : i64, tpu.core_type = #tpu.core_type<tc>, window_params = [{transform_indices = @transform_0, window_bounds = array<i64: 2, 8, 32>}, {pipeline_mode = #tpu.pipeline_mode<synchronous>, transform_indices = @transform_1, window_bounds = array<i64: 32, 384>}, {pipeline_mode = #tpu.pipeline_mode<synchronous>, transform_indices = @transform_2, window_bounds = array<i64: 8, 8>}, {transform_indices = @transform_3, window_bounds = array<i64: 2, 8, 128>}]} {
    %c0 = arith.constant 0 : index
    %c0_0 = arith.constant 0 : index
    %c0_1 = arith.constant 0 : index
    %0 = vector.load %arg1[%c0, %c0_0, %c0_1] : memref<2x8x32xf32, #tpu.memory_space<vmem>>, vector<2x8x32xf32>
    %1 = vector.shape_cast %0 : vector<2x8x32xf32> to vector<16x32xf32>
    %c0_2 = arith.constant 0 : index
    %c0_3 = arith.constant 0 : index
    %2 = vector.load %arg2[%c0_2, %c0_3] : memref<32x384xf32, #tpu.memory_space<vmem>>, vector<32x384xf32>
    %cst = arith.constant dense<0.000000e+00> : vector<16x384xf32>
    %3 = tpu.matmul %1, %2, %cst {dimension_numbers = #tpu.dot_dimension_numbers<[1], [0], [0], [1], [0, 0, 1, 1], [], []>} : vector<16x32xf32>, vector<32x384xf32>, vector<16x384xf32> -> vector<16x384xf32>
    %4 = vector.extract_strided_slice %3 {offsets = [0, 0], sizes = [16, 128], strides = [1, 1]} : vector<16x384xf32> to vector<16x128xf32>
    %5 = vector.shape_cast %4 : vector<16x128xf32> to vector<2x8x128xf32>
    %6 = vector.extract_strided_slice %3 {offsets = [0, 128], sizes = [16, 128], strides = [1, 1]} : vector<16x384xf32> to vector<16x128xf32>
    %7 = vector.shape_cast %6 : vector<16x128xf32> to vector<2x8x128xf32>
    %8 = vector.extract_strided_slice %3 {offsets = [0, 256], sizes = [16, 128], strides = [1, 1]} : vector<16x384xf32> to vector<16x128xf32>
    %9 = vector.shape_cast %8 : vector<16x128xf32> to vector<2x8x128xf32>
    "tpu.trace_start"() <{level = 10 : i32, message = "bqh,bkh->bqk"}> : () -> ()
    %cst_4 = arith.constant dense<0.000000e+00> : vector<2x8x8xf32>
    %10 = tpu.matmul %5, %7, %cst_4 {dimension_numbers = #tpu.dot_dimension_numbers<[2], [2], [1], [1], [0, 0, 0, 1, 1, 1], [0], [0]>} : vector<2x8x128xf32>, vector<2x8x128xf32>, vector<2x8x8xf32> -> vector<2x8x8xf32>
    "tpu.trace_stop"() : () -> ()
    %c0_5 = arith.constant 0 : index
    %c0_6 = arith.constant 0 : index
    %11 = vector.load %arg3[%c0_5, %c0_6] : memref<8x8xf32, #tpu.memory_space<vmem>>, vector<8x8xf32>
    %12 = vector.shape_cast %11 : vector<8x8xf32> to vector<1x8x8xf32>
    %13 = vector.broadcast %12 : vector<1x8x8xf32> to vector<2x8x8xf32>
    %14 = arith.addf %10, %13 : vector<2x8x8xf32>
    %cst_7 = arith.constant dense<0xFF800000> : vector<2x8xf32>
    %15 = vector.multi_reduction <maximumf>, %14, %cst_7 [2] : vector<2x8x8xf32> to vector<2x8xf32>
    %16 = vector.shape_cast %15 : vector<2x8xf32> to vector<2x8x1xf32>
    %17 = vector.broadcast %16 : vector<2x8x1xf32> to vector<2x8x8xf32>
    %18 = arith.subf %14, %17 : vector<2x8x8xf32>
    %19 = math.exp %18 : vector<2x8x8xf32>
    %cst_8 = arith.constant dense<0.000000e+00> : vector<2x8xf32>
    %20 = vector.multi_reduction <add>, %19, %cst_8 [2] : vector<2x8x8xf32> to vector<2x8xf32>
    %21 = vector.shape_cast %20 : vector<2x8xf32> to vector<2x8x1xf32>
    %22 = vector.broadcast %21 : vector<2x8x1xf32> to vector<2x8x8xf32>
    %23 = arith.divf %19, %22 : vector<2x8x8xf32>
    "tpu.trace_start"() <{level = 10 : i32, message = "bqk,bkh->bqh"}> : () -> ()
    %cst_9 = arith.constant dense<0.000000e+00> : vector<2x8x128xf32>
    %24 = tpu.matmul %23, %9, %cst_9 {dimension_numbers = #tpu.dot_dimension_numbers<[2], [1], [1], [2], [0, 0, 0, 1, 1, 2], [0], [0]>} : vector<2x8x8xf32>, vector<2x8x128xf32>, vector<2x8x128xf32> -> vector<2x8x128xf32>
    "tpu.trace_stop"() : () -> ()
    %c0_10 = arith.constant 0 : index
    %c0_11 = arith.constant 0 : index
    %c0_12 = arith.constant 0 : index
    %25 = vector.load %arg4[%c0_10, %c0_11, %c0_12] : memref<2x8x128xf32, #tpu.memory_space<vmem>>, vector<2x8x128xf32>
    tpu.vector_store %arg4[%c0_10, %c0_11, %c0_12], %24 {strides = array<i32>} : memref<2x8x128xf32, #tpu.memory_space<vmem>>, vector<2x8x128xf32>,
    return
  }
  func.func @transform_0(%arg0: i32) -> (i32, i32, i32) {
    %c0_i32 = arith.constant 0 : i32
    %c0_i32_0 = arith.constant 0 : i32
    %c0_i32_1 = arith.constant 0 : i32
    return %arg0, %c0_i32, %c0_i32_0 : i32, i32, i32
  }
  func.func @transform_1(%arg0: i32) -> (i32, i32) {
    %c0_i32 = arith.constant 0 : i32
    %c0_i32_0 = arith.constant 0 : i32
    %c0_i32_1 = arith.constant 0 : i32
    return %c0_i32, %c0_i32_0 : i32, i32
  }
  func.func @transform_2(%arg0: i32) -> (i32, i32) {
    %c0_i32 = arith.constant 0 : i32
    %c0_i32_0 = arith.constant 0 : i32
    %c0_i32_1 = arith.constant 0 : i32
    return %c0_i32, %c0_i32_0 : i32, i32
  }
  func.func @transform_3(%arg0: i32) -> (i32, i32, i32) {
    %c0_i32 = arith.constant 0 : i32
    %c0_i32_0 = arith.constant 0 : i32
    %c0_i32_1 = arith.constant 0 : i32
    return %arg0, %c0_i32, %c0_i32_0 : i32, i32, i32
  }
}

</mosaic_0001>

<llo_original>
// kernel: tpu_custom_call.1
$region0: #{tpu_custom_call.1}
  #allocation0 [shape = 'u32[]', space=smem, size = 0x4, offset = 0x4, fixed_abs, tag = 'smem constant byte address 0x4 - core index']
  #allocation1 [shape = 'u32[144,128]{1,0:T(1,128)}', space=vmem, size = 0x12000, scoped, tag = 'internal scratch']
  %s0 = inlined_call_operand.hbm [shape: f32[2,8,32], index: 0, kind: input, shape index: {}]
  %s1 = inlined_call_operand.hbm [shape: f32[32,384], index: 1, kind: input, shape index: {}]
  %s2 = inlined_call_operand.hbm [shape: f32[8,8], index: 2, kind: input, shape index: {}]
  %s3 = inlined_call_operand.hbm [shape: f32[2,8,128], index: 3, kind: output, shape index: {}]
  %s4 = sld [smem:[#allocation0]]
  $region34: #{tpu_custom_call.1} parent=0
    _
  %s6 = ssub.s32 1, %s4
  %s7 = scalar_select 0, %s6, %s4
  $region1: #{tpu_custom_call.1} parent=0
    #allocation2 [shape = 'u8[8192]{0}', space=vmem, size = 0x2000, scoped, tag = 'input window, operand 0, single buffered']
    #allocation3 [shape = 's32[1]{0}', space=sflag, size = 0x4, scoped, tag = 'scoped memory for tpu_custom_call.1']
    #allocation4 [shape = 's32[1]{0}', space=sflag, size = 0x4, scoped, tag = 'scoped memory for tpu_custom_call.1']
    #allocation5 [shape = 'u8[49152]{0}', space=vmem, size = 0xc000, scoped, tag = 'input window, operand 1, single buffered']
    #allocation6 [shape = 's32[1]{0}', space=sflag, size = 0x4, scoped, tag = 'scoped memory for tpu_custom_call.1']
    #allocation7 [shape = 'u8[4096]{0}', space=vmem, size = 0x1000, scoped, tag = 'input window, operand 2, single buffered']
    #allocation8 [shape = 'u8[8192]{0}', space=vmem, size = 0x2000, scoped, tag = 'output window, operand 0, single buffered']
    %8 = vsyncpa [#allocation3], 0
    %9 = vsyncpa [#allocation6], 0
    %10 = vsyncpa [#allocation4], 0
    // Predicated region
    $region2: #{tpu_custom_call.1} parent=1 // pred_check
      _
    $region3: #{tpu_custom_call.1} parent=1 // pred_check_branch
      %12 = sbr.rel (0) target = $region5
    $region4: #{tpu_custom_call.1} parent=1 // pred_region
      %s14 = ssub.s32 256, 256
      %15 = vsyncadd [#allocation3], %s14
      %s16 = sshll.u32 [#allocation2], 4
      %s17 = int_to_ptr.vmem [resolvable:$true] %s16
      %22 = dma.hbm_to_vmem [thread:$0]  %s0, 256, %s17, [#allocation3], 128, 128, 8
    $region5: #{tpu_custom_call.1} parent=1 // pred_fallthru
      _
    // Predicated region
    $region6: #{tpu_custom_call.1} parent=1 // pred_check
      _
    $region7: #{tpu_custom_call.1} parent=1 // pred_check_branch
      %24 = sbr.rel (0) target = $region9
    $region8: #{tpu_custom_call.1} parent=1 // pred_region
      %s26 = ssub.s32 1536, 1536
      %27 = vsyncadd [#allocation6], %s26
      %s28 = sshll.u32 [#allocation5], 4
      %s29 = int_to_ptr.vmem [resolvable:$true] %s28
      %34 = dma.hbm_to_vmem [thread:$0]  %s1, 1536, %s29, [#allocation6], 384, 384, 24
    $region9: #{tpu_custom_call.1} parent=1 // pred_fallthru
      _
    // Predicated region
    $region10: #{tpu_custom_call.1} parent=1 // pred_check
      _
    $region11: #{tpu_custom_call.1} parent=1 // pred_check_branch
      %36 = sbr.rel (0) target = $region13
    $region12: #{tpu_custom_call.1} parent=1 // pred_region
      %s38 = ssub.s32 128, 128
      %39 = vsyncadd [#allocation6], %s38
      %s41 = sshll.u32 [#allocation7], 4
      %s42 = int_to_ptr.vmem [resolvable:$true] %s41
      %44 = dma.hbm_to_vmem [thread:$0]  %s2, 128, %s42, [#allocation6]
    $region13: #{tpu_custom_call.1} parent=1 // pred_fallthru
      _
    // Predicated region
    $region14: #{tpu_custom_call.1} parent=1 // pred_check
      _
    $region15: #{tpu_custom_call.1} parent=1 // pred_check_branch
      %46 = sbr.rel (0) target = $region17
    $region16: #{tpu_custom_call.1} parent=1 // pred_region
      %47 = dma.done [#allocation3], 256
    $region17: #{tpu_custom_call.1} parent=1 // pred_fallthru
      _
    // Predicated region
    $region18: #{tpu_custom_call.1} parent=1 // pred_check
      _
    $region19: #{tpu_custom_call.1} parent=1 // pred_check_branch
      %49 = sbr.rel (0) target = $region21
    $region20: #{tpu_custom_call.1} parent=1 // pred_region
      %50 = dma.done [#allocation6], 1536
    $region21: #{tpu_custom_call.1} parent=1 // pred_fallthru
      _
    // Predicated region
    $region22: #{tpu_custom_call.1} parent=1 // pred_check
      _
    $region23: #{tpu_custom_call.1} parent=1 // pred_check_branch
      %52 = sbr.rel (0) target = $region25
    $region24: #{tpu_custom_call.1} parent=1 // pred_region
      %53 = dma.done [#allocation6], 128
    $region25: #{tpu_custom_call.1} parent=1 // pred_fallthru
      _
    %v54 = vld [vmem:[#allocation2] sm:$0xff]
    %v55 = vld [vmem:[#allocation2 + $0x8] sm:$0xff]
    %v56 = vld [vmem:[#allocation5] sm:$0xff]
    %v57 = vld [vmem:[#allocation5 + $0x8] sm:$0xff]
    %v58 = vld [vmem:[#allocation5 + $0x10] sm:$0xff]
    %v59 = vld [vmem:[#allocation5 + $0x18] sm:$0xff]
    %v60 = vld [vmem:[#allocation5 + $0x20] sm:$0xff]
    %v61 = vld [vmem:[#allocation5 + $0x28] sm:$0xff]
    %v62 = vld [vmem:[#allocation5 + $0x30] sm:$0xff]
    %v63 = vld [vmem:[#allocation5 + $0x38] sm:$0xff]
    %v64 = vld [vmem:[#allocation5 + $0x40] sm:$0xff]
    %v65 = vld [vmem:[#allocation5 + $0x48] sm:$0xff]
    %v66 = vld [vmem:[#allocation5 + $0x50] sm:$0xff]
    %v67 = vld [vmem:[#allocation5 + $0x58] sm:$0xff]
    %vm68 = vcmask 261120
    %v70 = vsel %vm68, %v54, 0
    %v73 = vsel %vm68, %v55, 0
    %75 = vmatprep.subr.mxu0 %v57
    %76 = vmatpush1.msra.mxu0 %v56
    %77 = vmatprep.subr.mxu0 %v60
    %78 = vmatpush1.msra.mxu0 %v59
    %79 = vmatprep.subr.mxu0 %v63
    %80 = vmatpush1.msra.mxu0 %v62
    %81 = vmatprep.subr.mxu0 %v66
    %82 = vmatpush1.msra.mxu0 %v65
    %83 = vmatprep.subr.mxu0 0.0
    %84 = vmatpush1.msra.mxu0 0.0
    %85 = vmatprep.subr.mxu0 0.0
    %86 = vmatpush1.msra.mxu0 0.0
    %87 = vmatprep.subr.mxu0 0.0
    %88 = vmatpush1.msra.mxu0 0.0
    %89 = vmatprep.subr.mxu0 0.0
    %90 = vmatpush1.msra.mxu0 0.0
    %91 = vmatprep.subr.mxu0 0.0
    %92 = vmatpush1.msra.mxu0 0.0
    %93 = vmatprep.subr.mxu0 0.0
    %94 = vmatpush1.msra.mxu0 0.0
    %95 = vmatprep.subr.mxu0 0.0
    %96 = vmatpush1.msra.mxu0 0.0
    %97 = vmatprep.subr.mxu0 0.0
    %98 = vmatpush1.msra.mxu0 0.0
    %99 = vmatprep.subr.mxu0 0.0
    %100 = vmatpush1.msra.mxu0 0.0
    %101 = vmatprep.subr.mxu0 0.0
    %102 = vmatpush1.msra.mxu0 0.0
    %103 = vmatprep.subr.mxu0 0.0
    %104 = vmatpush1.msra.mxu0 0.0
    %105 = vmatprep.subr.mxu0 0.0
    %106 = vmatpush1.msra.mxu0 0.0
    %107 = vmatprep.subr.mxu0 0.0
    %108 = vmatpush1.msra.mxu0 0.0
    %109 = vmatprep.subr.mxu0 0.0
    %110 = vmatpush1.msra.mxu0 0.0
    %111 = vmatprep.subr.mxu0 0.0
    %112 = vmatpush1.msra.mxu0 0.0
    %113 = vmatprep.subr.mxu0 0.0
    %114 = vmatpush1.msra.mxu0 0.0
    %115 = vmatprep.subr.mxu0 0.0
    %116 = vmatpush1.msra.mxu0 0.0
    %117 = vmatprep.subr.mxu0 0.0
    %118 = vmatpush1.msra.mxu0 0.0
    %119 = vmatprep.subr.mxu0 0.0
    %120 = vmatpush1.msra.mxu0 0.0
    %121 = vmatprep.subr.mxu0 0.0
    %122 = vmatpush1.msra.mxu0 0.0
    %123 = vmatprep.subr.mxu0 0.0
    %124 = vmatpush1.msra.mxu0 0.0
    %125 = vmatprep.subr.mxu0 0.0
    %126 = vmatpush1.msra.mxu0 0.0
    %127 = vmatprep.subr.mxu0 0.0
    %128 = vmatpush1.msra.mxu0 0.0
    %129 = vmatprep.subr.mxu0 0.0
    %130 = vmatpush1.msra.mxu0 0.0
    %131 = vmatprep.subr.mxu0 0.0
    %132 = vmatpush1.msra.mxu0 0.0
    %133 = vmatprep.subr.mxu0 0.0
    %134 = vmatpush1.msra.mxu0 0.0
    %135 = vmatprep.subr.mxu0 0.0
    %136 = vmatpush1.msra.mxu0 0.0
    %137 = vmatprep.subr.mxu0 0.0
    %138 = vmatpush1.msra.mxu0 0.0
    %139 = vmatprep.mubr.f32.mxu0 0.0
    %140 = vmatmul.mubr.f32.gmra.mrb[0].mxu0 %v70
    %v141 = vpop.f32.mrb[0].mxu0
    %v142 = vadd.f32 0.0, %v141
    %v143 = vpop.f32.mrb[0].mxu0
    %v144 = vadd.f32 0.0, %v143
    %145 = vmatprep.mubr.f32.mxu0 0.0
    %146 = vmatmul.mubr.f32.gmra.mrb[0].mxu0 %v73
    %v147 = vpop.f32.mrb[0].mxu0
    %v148 = vadd.f32 0.0, %v147
    %v149 = vpop.f32.mrb[0].mxu0
    %v150 = vadd.f32 0.0, %v149
    %151 = vdwg.mxu0
    %152 = vmatprep.subr.mxu0 0.0
    %153 = vmatpush1.msra.mxu0 %v58
    %154 = vmatprep.subr.mxu0 0.0
    %155 = vmatpush1.msra.mxu0 %v61
    %156 = vmatprep.subr.mxu0 0.0
    %157 = vmatpush1.msra.mxu0 %v64
    %158 = vmatprep.subr.mxu0 0.0
    %159 = vmatpush1.msra.mxu0 %v67
    %160 = vmatprep.subr.mxu0 0.0
    %161 = vmatpush1.msra.mxu0 0.0
    %162 = vmatprep.subr.mxu0 0.0
    %163 = vmatpush1.msra.mxu0 0.0
    %164 = vmatprep.subr.mxu0 0.0
    %165 = vmatpush1.msra.mxu0 0.0
    %166 = vmatprep.subr.mxu0 0.0
    %167 = vmatpush1.msra.mxu0 0.0
    %168 = vmatprep.subr.mxu0 0.0
    %169 = vmatpush1.msra.mxu0 0.0
    %170 = vmatprep.subr.mxu0 0.0
    %171 = vmatpush1.msra.mxu0 0.0
    %172 = vmatprep.subr.mxu0 0.0
    %173 = vmatpush1.msra.mxu0 0.0
    %174 = vmatprep.subr.mxu0 0.0
    %175 = vmatpush1.msra.mxu0 0.0
    %176 = vmatprep.subr.mxu0 0.0
    %177 = vmatpush1.msra.mxu0 0.0
    %178 = vmatprep.subr.mxu0 0.0
    %179 = vmatpush1.msra.mxu0 0.0
    %180 = vmatprep.subr.mxu0 0.0
    %181 = vmatpush1.msra.mxu0 0.0
    %182 = vmatprep.subr.mxu0 0.0
    %183 = vmatpush1.msra.mxu0 0.0
    %184 = vmatprep.subr.mxu0 0.0
    %185 = vmatpush1.msra.mxu0 0.0
    %186 = vmatprep.subr.mxu0 0.0
    %187 = vmatpush1.msra.mxu0 0.0
    %188 = vmatprep.subr.mxu0 0.0
    %189 = vmatpush1.msra.mxu0 0.0
    %190 = vmatprep.subr.mxu0 0.0
    %191 = vmatpush1.msra.mxu0 0.0
    %192 = vmatprep.subr.mxu0 0.0
    %193 = vmatpush1.msra.mxu0 0.0
    %194 = vmatprep.subr.mxu0 0.0
    %195 = vmatpush1.msra.mxu0 0.0
    %196 = vmatprep.subr.mxu0 0.0
    %197 = vmatpush1.msra.mxu0 0.0
    %198 = vmatprep.subr.mxu0 0.0
    %199 = vmatpush1.msra.mxu0 0.0
    %200 = vmatprep.subr.mxu0 0.0
    %201 = vmatpush1.msra.mxu0 0.0
    %202 = vmatprep.subr.mxu0 0.0
    %203 = vmatpush1.msra.mxu0 0.0
    %204 = vmatprep.subr.mxu0 0.0
    %205 = vmatpush1.msra.mxu0 0.0
    %206 = vmatprep.subr.mxu0 0.0
    %207 = vmatpush1.msra.mxu0 0.0
    %208 = vmatprep.subr.mxu0 0.0
    %209 = vmatpush1.msra.mxu0 0.0
    %210 = vmatprep.subr.mxu0 0.0
    %211 = vmatpush1.msra.mxu0 0.0
    %212 = vmatprep.subr.mxu0 0.0
    %213 = vmatpush1.msra.mxu0 0.0
    %214 = vmatprep.subr.mxu0 0.0
    %215 = vmatpush1.msra.mxu0 0.0
    %216 = vmatprep.mubr.f32.mxu0 0.0
    %217 = vmatmul.mubr.f32.gmra.mrb[0].mxu0 %v70
    %v218 = vpop.f32.mrb[0].mxu0
    %v219 = vadd.f32 0.0, %v218
    %v220 = vpop.f32.mrb[0].mxu0
    %221 = vmatprep.mubr.f32.mxu0 0.0
    %222 = vmatmul.mubr.f32.gmra.mrb[0].mxu0 %v73
    %v223 = vpop.f32.mrb[0].mxu0
    %v224 = vadd.f32 0.0, %v223
    %v225 = vpop.f32.mrb[0].mxu0
    %226 = vdwg.mxu0
    %v227 = vld [vmem:[#allocation7] sm:$0xff]
    %228 = vmatprep.subr.mxu0 0.0
    %229 = vmatpush1.xpose.msra.mxu0 %v144
    %230 = vmatprep.subr.mxu0 0.0
    %231 = vmatpush1.xpose.msra.mxu0 0.0
    %232 = vmatprep.subr.mxu0 0.0
    %233 = vmatpush1.xpose.msra.mxu0 0.0
    %234 = vmatprep.subr.mxu0 0.0
    %235 = vmatpush1.xpose.msra.mxu0 0.0
    %236 = vmatprep.subr.mxu0 0.0
    %237 = vmatpush1.xpose.msra.mxu0 0.0
    %238 = vmatprep.subr.mxu0 0.0
    %239 = vmatpush1.xpose.msra.mxu0 0.0
    %240 = vmatprep.subr.mxu0 0.0
    %241 = vmatpush1.xpose.msra.mxu0 0.0
    %242 = vmatprep.subr.mxu0 0.0
    %243 = vmatpush1.xpose.msra.mxu0 0.0
    %244 = vmatprep.subr.mxu0 0.0
    %245 = vmatpush1.xpose.msra.mxu0 0.0
    %246 = vmatprep.subr.mxu0 0.0
    %247 = vmatpush1.xpose.msra.mxu0 0.0
    %248 = vmatprep.subr.mxu0 0.0
    %249 = vmatpush1.xpose.msra.mxu0 0.0
    %250 = vmatprep.subr.mxu0 0.0
    %251 = vmatpush1.xpose.msra.mxu0 0.0
    %252 = vmatprep.subr.mxu0 0.0
    %253 = vmatpush1.xpose.msra.mxu0 0.0
    %254 = vmatprep.subr.mxu0 0.0
    %255 = vmatpush1.xpose.msra.mxu0 0.0
    %256 = vmatprep.subr.mxu0 0.0
    %257 = vmatpush1.xpose.msra.mxu0 0.0
    %258 = vmatprep.subr.mxu0 0.0
    %259 = vmatpush1.xpose.msra.mxu0 0.0
    %260 = vmatprep.subr.mxu0 0.0
    %261 = vmatpush1.xpose.msra.mxu0 0.0
    %262 = vmatprep.subr.mxu0 0.0
    %263 = vmatpush1.xpose.msra.mxu0 0.0
    %264 = vmatprep.subr.mxu0 0.0
    %265 = vmatpush1.xpose.msra.mxu0 0.0
    %266 = vmatprep.subr.mxu0 0.0
    %267 = vmatpush1.xpose.msra.mxu0 0.0
    %268 = vmatprep.subr.mxu0 0.0
    %269 = vmatpush1.xpose.msra.mxu0 0.0
    %270 = vmatprep.subr.mxu0 0.0
    %271 = vmatpush1.xpose.msra.mxu0 0.0
    %272 = vmatprep.subr.mxu0 0.0
    %273 = vmatpush1.xpose.msra.mxu0 0.0
    %274 = vmatprep.subr.mxu0 0.0
    %275 = vmatpush1.xpose.msra.mxu0 0.0
    %276 = vmatprep.subr.mxu0 0.0
    %277 = vmatpush1.xpose.msra.mxu0 0.0
    %278 = vmatprep.subr.mxu0 0.0
    %279 = vmatpush1.xpose.msra.mxu0 0.0
    %280 = vmatprep.subr.mxu0 0.0
    %281 = vmatpush1.xpose.msra.mxu0 0.0
    %282 = vmatprep.subr.mxu0 0.0
    %283 = vmatpush1.xpose.msra.mxu0 0.0
    %284 = vmatprep.subr.mxu0 0.0
    %285 = vmatpush1.xpose.msra.mxu0 0.0
    %286 = vmatprep.subr.mxu0 0.0
    %287 = vmatpush1.xpose.msra.mxu0 0.0
    %288 = vmatprep.subr.mxu0 0.0
    %289 = vmatpush1.xpose.msra.mxu0 0.0
    %290 = vmatprep.subr.mxu0 0.0
    %291 = vmatpush1.xpose.msra.mxu0 0.0
    %292 = vmatprep.mubr.f32.mxu0 0.0
    %293 = vmatmul.mubr.f32.gmra.mrb[0].mxu0 %v142
    %v294 = vpop.f32.mrb[0].mxu0
    %v295 = vadd.f32 %v227, %v294
    %v296 = vpop.f32.mrb[0].mxu0
    %297 = vdwg.mxu0
    %298 = vmatprep.subr.mxu0 0.0
    %299 = vmatpush1.xpose.msra.mxu0 %v150
    %300 = vmatprep.subr.mxu0 0.0
    %301 = vmatpush1.xpose.msra.mxu0 0.0
    %302 = vmatprep.subr.mxu0 0.0
    %303 = vmatpush1.xpose.msra.mxu0 0.0
    %304 = vmatprep.subr.mxu0 0.0
    %305 = vmatpush1.xpose.msra.mxu0 0.0
    %306 = vmatprep.subr.mxu0 0.0
    %307 = vmatpush1.xpose.msra.mxu0 0.0
    %308 = vmatprep.subr.mxu0 0.0
    %309 = vmatpush1.xpose.msra.mxu0 0.0
    %310 = vmatprep.subr.mxu0 0.0
    %311 = vmatpush1.xpose.msra.mxu0 0.0
    %312 = vmatprep.subr.mxu0 0.0
    %313 = vmatpush1.xpose.msra.mxu0 0.0
    %314 = vmatprep.subr.mxu0 0.0
    %315 = vmatpush1.xpose.msra.mxu0 0.0
    %316 = vmatprep.subr.mxu0 0.0
    %317 = vmatpush1.xpose.msra.mxu0 0.0
    %318 = vmatprep.subr.mxu0 0.0
    %319 = vmatpush1.xpose.msra.mxu0 0.0
    %320 = vmatprep.subr.mxu0 0.0
    %321 = vmatpush1.xpose.msra.mxu0 0.0
    %322 = vmatprep.subr.mxu0 0.0
    %323 = vmatpush1.xpose.msra.mxu0 0.0
    %324 = vmatprep.subr.mxu0 0.0
    %325 = vmatpush1.xpose.msra.mxu0 0.0
    %326 = vmatprep.subr.mxu0 0.0
    %327 = vmatpush1.xpose.msra.mxu0 0.0
    %328 = vmatprep.subr.mxu0 0.0
    %329 = vmatpush1.xpose.msra.mxu0 0.0
    %330 = vmatprep.subr.mxu0 0.0
    %331 = vmatpush1.xpose.msra.mxu0 0.0
    %332 = vmatprep.subr.mxu0 0.0
    %333 = vmatpush1.xpose.msra.mxu0 0.0
    %334 = vmatprep.subr.mxu0 0.0
    %335 = vmatpush1.xpose.msra.mxu0 0.0
    %336 = vmatprep.subr.mxu0 0.0
    %337 = vmatpush1.xpose.msra.mxu0 0.0
    %338 = vmatprep.subr.mxu0 0.0
    %339 = vmatpush1.xpose.msra.mxu0 0.0
    %340 = vmatprep.subr.mxu0 0.0
    %341 = vmatpush1.xpose.msra.mxu0 0.0
    %342 = vmatprep.subr.mxu0 0.0
    %343 = vmatpush1.xpose.msra.mxu0 0.0
    %344 = vmatprep.subr.mxu0 0.0
    %345 = vmatpush1.xpose.msra.mxu0 0.0
    %346 = vmatprep.subr.mxu0 0.0
    %347 = vmatpush1.xpose.msra.mxu0 0.0
    %348 = vmatprep.subr.mxu0 0.0
    %349 = vmatpush1.xpose.msra.mxu0 0.0
    %350 = vmatprep.subr.mxu0 0.0
    %351 = vmatpush1.xpose.msra.mxu0 0.0
    %352 = vmatprep.subr.mxu0 0.0
    %353 = vmatpush1.xpose.msra.mxu0 0.0
    %354 = vmatprep.subr.mxu0 0.0
    %355 = vmatpush1.xpose.msra.mxu0 0.0
    %356 = vmatprep.subr.mxu0 0.0
    %357 = vmatpush1.xpose.msra.mxu0 0.0
    %358 = vmatprep.subr.mxu0 0.0
    %359 = vmatpush1.xpose.msra.mxu0 0.0
    %360 = vmatprep.subr.mxu0 0.0
    %361 = vmatpush1.xpose.msra.mxu0 0.0
    %362 = vmatprep.mubr.f32.mxu0 0.0
    %363 = vmatmul.mubr.f32.gmra.mrb[0].mxu0 %v148
    %v364 = vpop.f32.mrb[0].mxu0
    %v365 = vadd.f32 %v227, %v364
    %v366 = vpop.f32.mrb[0].mxu0
    %367 = vdwg.mxu0
    %vm368 = vcmask 64512
    %v369 = vsel %vm368, %v295, -inf
    %370 = vmax.xlane.f32.xlu0 %v369
    %v371 = vpop.xlane.xlu0 %370
    %v372 = vsel %vm368, %v365, -inf
    %373 = vmax.xlane.f32.xlu0 %v372
    %v374 = vpop.xlane.xlu0 %373
    %v375 = vsub.f32 %v295, %v371
    %v376 = vsub.f32 %v365, %v374
    %v377 = vmul.f32 %v375, 1.442695
    %v378 = vpow.pop %v377
    %v379 = vmul.f32 %v376, 1.442695
    %v380 = vpow.pop %v379
    %v381 = vsel %vm368, %v378, 0.0
    %382 = vadd.xlane.f32.xlu0 %v381
    %v383 = vpop.xlane.xlu0 %382
    %v384 = vsel %vm368, %v380, 0.0
    %385 = vadd.xlane.f32.xlu0 %v384
    %v386 = vpop.xlane.xlu0 %385
    %v387 = vrcp.pop %v383
    %v388 = vmul.f32 %v378, %v387
    %v389 = vrcp.pop %v386
    %v390 = vmul.f32 %v380, %v389
    %v392 = vsel %vm368, %v388, 0
    %394 = vmatprep.subr.mxu0 0.0
    %395 = vmatpush1.msra.mxu0 %v219
    %396 = vmatprep.subr.mxu0 0.0
    %397 = vmatpush1.msra.mxu0 0.0
    %398 = vmatprep.subr.mxu0 0.0
    %399 = vmatpush1.msra.mxu0 0.0
    %400 = vmatprep.subr.mxu0 0.0
    %401 = vmatpush1.msra.mxu0 0.0
    %402 = vmatprep.subr.mxu0 0.0
    %403 = vmatpush1.msra.mxu0 0.0
    %404 = vmatprep.subr.mxu0 0.0
    %405 = vmatpush1.msra.mxu0 0.0
    %406 = vmatprep.subr.mxu0 0.0
    %407 = vmatpush1.msra.mxu0 0.0
    %408 = vmatprep.subr.mxu0 0.0
    %409 = vmatpush1.msra.mxu0 0.0
    %410 = vmatprep.subr.mxu0 0.0
    %411 = vmatpush1.msra.mxu0 0.0
    %412 = vmatprep.subr.mxu0 0.0
    %413 = vmatpush1.msra.mxu0 0.0
    %414 = vmatprep.subr.mxu0 0.0
    %415 = vmatpush1.msra.mxu0 0.0
    %416 = vmatprep.subr.mxu0 0.0
    %417 = vmatpush1.msra.mxu0 0.0
    %418 = vmatprep.subr.mxu0 0.0
    %419 = vmatpush1.msra.mxu0 0.0
    %420 = vmatprep.subr.mxu0 0.0
    %421 = vmatpush1.msra.mxu0 0.0
    %422 = vmatprep.subr.mxu0 0.0
    %423 = vmatpush1.msra.mxu0 0.0
    %424 = vmatprep.subr.mxu0 0.0
    %425 = vmatpush1.msra.mxu0 0.0
    %426 = vmatprep.subr.mxu0 0.0
    %427 = vmatpush1.msra.mxu0 0.0
    %428 = vmatprep.subr.mxu0 0.0
    %429 = vmatpush1.msra.mxu0 0.0
    %430 = vmatprep.subr.mxu0 0.0
    %431 = vmatpush1.msra.mxu0 0.0
    %432 = vmatprep.subr.mxu0 0.0
    %433 = vmatpush1.msra.mxu0 0.0
    %434 = vmatprep.subr.mxu0 0.0
    %435 = vmatpush1.msra.mxu0 0.0
    %436 = vmatprep.subr.mxu0 0.0
    %437 = vmatpush1.msra.mxu0 0.0
    %438 = vmatprep.subr.mxu0 0.0
    %439 = vmatpush1.msra.mxu0 0.0
    %440 = vmatprep.subr.mxu0 0.0
    %441 = vmatpush1.msra.mxu0 0.0
    %442 = vmatprep.subr.mxu0 0.0
    %443 = vmatpush1.msra.mxu0 0.0
    %444 = vmatprep.subr.mxu0 0.0
    %445 = vmatpush1.msra.mxu0 0.0
    %446 = vmatprep.subr.mxu0 0.0
    %447 = vmatpush1.msra.mxu0 0.0
    %448 = vmatprep.subr.mxu0 0.0
    %449 = vmatpush1.msra.mxu0 0.0
    %450 = vmatprep.subr.mxu0 0.0
    %451 = vmatpush1.msra.mxu0 0.0
    %452 = vmatprep.subr.mxu0 0.0
    %453 = vmatpush1.msra.mxu0 0.0
    %454 = vmatprep.subr.mxu0 0.0
    %455 = vmatpush1.msra.mxu0 0.0
    %456 = vmatprep.subr.mxu0 0.0
    %457 = vmatpush1.msra.mxu0 0.0
    %458 = vmatprep.mubr.f32.mxu0 0.0
    %459 = vmatmul.mubr.f32.gmra.mrb[0].mxu0 %v392
    %v460 = vpop.f32.mrb[0].mxu0
    %v461 = vadd.f32 0.0, %v460
    %v462 = vpop.f32.mrb[0].mxu0
    %463 = vdwg.mxu0
    %v465 = vsel %vm368, %v390, 0
    %467 = vmatprep.subr.mxu0 0.0
    %468 = vmatpush1.msra.mxu0 %v224
    %469 = vmatprep.subr.mxu0 0.0
    %470 = vmatpush1.msra.mxu0 0.0
    %471 = vmatprep.subr.mxu0 0.0
    %472 = vmatpush1.msra.mxu0 0.0
    %473 = vmatprep.subr.mxu0 0.0
    %474 = vmatpush1.msra.mxu0 0.0
    %475 = vmatprep.subr.mxu0 0.0
    %476 = vmatpush1.msra.mxu0 0.0
    %477 = vmatprep.subr.mxu0 0.0
    %478 = vmatpush1.msra.mxu0 0.0
    %479 = vmatprep.subr.mxu0 0.0
    %480 = vmatpush1.msra.mxu0 0.0
    %481 = vmatprep.subr.mxu0 0.0
    %482 = vmatpush1.msra.mxu0 0.0
    %483 = vmatprep.subr.mxu0 0.0
    %484 = vmatpush1.msra.mxu0 0.0
    %485 = vmatprep.subr.mxu0 0.0
    %486 = vmatpush1.msra.mxu0 0.0
    %487 = vmatprep.subr.mxu0 0.0
    %488 = vmatpush1.msra.mxu0 0.0
    %489 = vmatprep.subr.mxu0 0.0
    %490 = vmatpush1.msra.mxu0 0.0
    %491 = vmatprep.subr.mxu0 0.0
    %492 = vmatpush1.msra.mxu0 0.0
    %493 = vmatprep.subr.mxu0 0.0
    %494 = vmatpush1.msra.mxu0 0.0
    %495 = vmatprep.subr.mxu0 0.0
    %496 = vmatpush1.msra.mxu0 0.0
    %497 = vmatprep.subr.mxu0 0.0
    %498 = vmatpush1.msra.mxu0 0.0
    %499 = vmatprep.subr.mxu0 0.0
    %500 = vmatpush1.msra.mxu0 0.0
    %501 = vmatprep.subr.mxu0 0.0
    %502 = vmatpush1.msra.mxu0 0.0
    %503 = vmatprep.subr.mxu0 0.0
    %504 = vmatpush1.msra.mxu0 0.0
    %505 = vmatprep.subr.mxu0 0.0
    %506 = vmatpush1.msra.mxu0 0.0
    %507 = vmatprep.subr.mxu0 0.0
    %508 = vmatpush1.msra.mxu0 0.0
    %509 = vmatprep.subr.mxu0 0.0
    %510 = vmatpush1.msra.mxu0 0.0
    %511 = vmatprep.subr.mxu0 0.0
    %512 = vmatpush1.msra.mxu0 0.0
    %513 = vmatprep.subr.mxu0 0.0
    %514 = vmatpush1.msra.mxu0 0.0
    %515 = vmatprep.subr.mxu0 0.0
    %516 = vmatpush1.msra.mxu0 0.0
    %517 = vmatprep.subr.mxu0 0.0
    %518 = vmatpush1.msra.mxu0 0.0
    %519 = vmatprep.subr.mxu0 0.0
    %520 = vmatpush1.msra.mxu0 0.0
    %521 = vmatprep.subr.mxu0 0.0
    %522 = vmatpush1.msra.mxu0 0.0
    %523 = vmatprep.subr.mxu0 0.0
    %524 = vmatpush1.msra.mxu0 0.0
    %525 = vmatprep.subr.mxu0 0.0
    %526 = vmatpush1.msra.mxu0 0.0
    %527 = vmatprep.subr.mxu0 0.0
    %528 = vmatpush1.msra.mxu0 0.0
    %529 = vmatprep.subr.mxu0 0.0
    %530 = vmatpush1.msra.mxu0 0.0
    %531 = vmatprep.mubr.f32.mxu0 0.0
    %532 = vmatmul.mubr.f32.gmra.mrb[0].mxu0 %v465
    %v533 = vpop.f32.mrb[0].mxu0
    %v534 = vadd.f32 0.0, %v533
    %v535 = vpop.f32.mrb[0].mxu0
    %536 = vdwg.mxu0
    %537 = vst [vmem:[#allocation8] sm:$0xff] %v461
    %538 = vst [vmem:[#allocation8 + $0x8] sm:$0xff] %v534
    // Predicated region
    $region26: #{tpu_custom_call.1} parent=1 // pred_check
      _
    $region27: #{tpu_custom_call.1} parent=1 // pred_check_branch
      %540 = sbr.rel (0) target = $region29
    $region28: #{tpu_custom_call.1} parent=1 // pred_region
      %s542 = ssub.s32 256, 256
      %543 = vsyncadd [#allocation4], %s542
      %s544 = sshll.u32 [#allocation8], 4
      %s545 = int_to_ptr.vmem [resolvable:$true] %s544
      %550 = dma.vmem_to_hbm [thread:$0]  %s545, 256, %s3, [#allocation4], 128, 128, 8
    $region29: #{tpu_custom_call.1} parent=1 // pred_fallthru
      _
    // Predicated region
    $region30: #{tpu_custom_call.1} parent=1 // pred_check
      _
    $region31: #{tpu_custom_call.1} parent=1 // pred_check_branch
      %552 = sbr.rel (0) target = $region33
    $region32: #{tpu_custom_call.1} parent=1 // pred_region
      %553 = dma.done [#allocation4], 256
    $region33: #{tpu_custom_call.1} parent=1 // pred_fallthru
      _
    %554 = vsyncpa [#allocation3], 1
    %555 = vsyncpa [#allocation6], 1
    %556 = vsyncpa [#allocation4], 1

</llo_original>
